<compile_context>
chip_gen: v5e
topology: v5e:2x2
jax: 0.10.0
libtpu: 0.0.40
codegen_flags: <defaults>
</compile_context>

<pallas_src>
import jax
import jax.numpy as jnp
from jax import lax
from jax.experimental import pallas as pl
from jax.experimental.pallas import tpu as pltpu


def _round_up(v, m):
    return (v + m - 1) // m * m


def _cdiv(a, b):
    return (a + b - 1) // b


def _tpu_vmem_and_cores():
    """Best-effort query of per-TensorCore VMEM capacity and TensorCore count."""
    vmem_bytes = 128 << 20          # v5e/v6e default
    num_cores = 1
    try:
        info = pltpu.get_tpu_info()
        for name in ("vmem_capacity_bytes", "vmem_bytes", "vmem_capacity"):
            v = getattr(info, name, None)
            if v:
                vmem_bytes = int(v)
                break
        for name in ("num_cores", "tensor_cores_per_chip", "cores_per_chip",
                     "num_tensorcores"):
            v = getattr(info, name, None)
            if v:
                num_cores = int(v)
                break
    except Exception:               # hardware query only; conservative fallback
        pass
    if vmem_bytes <= (64 << 20):    # v7x-like: 64 MiB per TC, 2 TCs per chip
        num_cores = max(num_cores, 2)
    return vmem_bytes, num_cores


def _make_kernel(n_axis, tn):
    def kernel(alpha_ref, x_ref, w_ref, b_ref, o_ref):
        # alpha_ref: SMEM (1,) f32 | x_ref: (tm, Dp) | w_ref: (Dp, tn) in [in, out] layout
        # b_ref: (1, tn) | o_ref: (tm, tn)
        j = pl.program_id(n_axis)                        # output-feature tile index
        # MXU: plain x @ W (weight pre-transposed to [in, out]), f32 accumulation.
        y = lax.dot_general(
            x_ref[...], w_ref[...],
            dimension_numbers=(((1,), (0,)), ((), ())),
            preferred_element_type=jnp.float32)
        y = y + b_ref[...].astype(jnp.float32)           # (1, tn) broadcasts over rows
        # Skip path: 128-aligned lane slice of the already-resident matmul operand.
        off = pl.multiple_of(j * tn, 128)
        x_skip = x_ref[:, pl.ds(off, tn)].astype(jnp.float32)
        alpha = alpha_ref[0]
        # Simplex (convex) combination: alpha*x + (1-alpha)*y == x + (1-alpha)*(y - x)
        o_ref[...] = (x_skip + (1.0 - alpha) * (y - x_skip)).astype(o_ref.dtype)
    return kernel


def prepare_simplex_linear_params(w, b):
    """One-time (parameter-init-time) weight prep: pad the feature dim to a lane-dense
    multiple of 128 and transpose the PyTorch [out, in] weight to [in, out]."""
    D = w.shape[0]
    assert w.shape == (D, D) and b.shape == (D,)
    Dp = _round_up(D, 128)
    w_t = jnp.asarray(w).T                               # [in, out]
    b = jnp.asarray(b)
    if Dp != D:
        w_t = jnp.pad(w_t, ((0, Dp - D), (0, Dp - D)))
        b = jnp.pad(b, (0, Dp - D))
    return w_t, b.reshape(1, Dp)


def simplex_linear(x, w_prep, b_prep, skip_logit, *, learnable_skip=True,
                   tm=None, tn=None):
    B, D = x.shape
    Dp = w_prep.shape[0]
    assert w_prep.shape == (Dp, Dp) and b_prep.shape == (1, Dp) and Dp >= D
    dtype = x.dtype
    isz = dtype.itemsize

    if learnable_skip:
        alpha = jax.nn.sigmoid(jnp.asarray(skip_logit, jnp.float32))
    else:
        alpha = jnp.asarray(0.5, jnp.float32)            # fixed skip weight
    alpha = jnp.reshape(alpha, (1,)).astype(jnp.float32)

    # Only the activation needs per-call padding; the weight/bias were padded at init.
    x_p = jnp.pad(x, ((0, 0), (0, Dp - D))) if Dp != D else x

    vmem_bytes, num_cores = _tpu_vmem_and_cores()
    if vmem_bytes >= (96 << 20):                         # v5e / v6e: 128 MiB VMEM
        tile_budget = 96 << 20
        vmem_cap = 112 << 20
    else:                                                # v7x: 64 MiB per TensorCore
        tile_budget = 36 << 20
        vmem_cap = 52 << 20

    # ---- output-feature tile ----
    if tn is None:
        if Dp <= 512:
            tn = Dp
        elif Dp % 256 == 0:
            tn = 256
        else:
            tn = 128
    assert Dp % tn == 0 and tn % 128 == 0
    num_n = Dp // tn

    # ---- batch tile: VMEM-budget driven, MXU-aligned ----
    tm_user = tm is not None
    if not tm_user:
        fixed = (2 * Dp * tn + 2 * tn) * isz             # dbuf weight + dbuf bias
        per_row = (2 * Dp + 2 * tn) * isz                # dbuf x + dbuf out
        tm = max(8, (tile_budget - fixed) // max(per_row, 1))
        tm = min(tm, 1024)
        if tm >= B:
            tm = B                                       # full-extent block is allowed
        else:
            for align in (256, 128, 8):
                if tm >= align:
                    tm = (tm // align) * align
                    break
    num_m = _cdiv(B, tm)

    # Two-TensorCore chips only: guarantee >= 2 grid steps so both TCs get work.
    if (not tm_user) and num_cores >= 2 and num_m * num_n < 2 and B >= 16:
        half = max(8, tm // 2)
        for align in (256, 128, 8):
            if half >= align:
                half = (half // align) * align
                break
        tm = half
        num_m = _cdiv(B, tm)

    # ---- grid-axis order: minimize HBM re-reads ----
    #   weight-innermost: W streamed num_m times, x streamed once.
    #   batch-innermost:  x streamed num_n times, W streamed once.
    batch_inner = (num_m - 1) * Dp > (num_n - 1) * B

    if batch_inner:
        grid = (num_n, num_m)
        n_axis = 0
        x_spec = pl.BlockSpec((tm, Dp), lambda j, i: (i, 0))
        w_spec = pl.BlockSpec((Dp, tn), lambda j, i: (0, j))   # revisit-resident over i
        b_spec = pl.BlockSpec((1, tn), lambda j, i: (0, j))
        o_spec = pl.BlockSpec((tm, tn), lambda j, i: (i, j))
        streamed = num_n * B * Dp + Dp * Dp + B * Dp
    else:
        grid = (num_m, num_n)
        n_axis = 1
        x_spec = pl.BlockSpec((tm, Dp), lambda i, j: (i, 0))   # revisit-resident over j
        w_spec = pl.BlockSpec((Dp, tn), lambda i, j: (0, j))
        b_spec = pl.BlockSpec((1, tn), lambda i, j: (0, j))
        o_spec = pl.BlockSpec((tm, tn), lambda i, j: (i, j))
        streamed = B * Dp + num_m * Dp * Dp + B * Dp

    cost = pl.CostEstimate(
        flops=2 * B * Dp * Dp,
        transcendentals=0,
        bytes_accessed=int(isz * streamed + isz * Dp + 4))

    est = (2 * tm * Dp + 2 * Dp * tn + 2 * tm * tn + 2 * tn) * isz
    vmem_limit = int(min(max(3 * est // 2 + (2 << 20), 32 << 20), vmem_cap))

    out_p = pl.pallas_call(
        _make_kernel(n_axis, tn),
        out_shape=jax.ShapeDtypeStruct((B, Dp), dtype),
        grid_spec=pltpu.PrefetchScalarGridSpec(
            num_scalar_prefetch=0,
            grid=grid,
            in_specs=[
                pl.BlockSpec(memory_space=pltpu.MemorySpace.SMEM),  # alpha scalar
                x_spec,                                             # activations
                w_spec,                                             # W [in, out] tile
                b_spec,                                             # bias tile
            ],
            out_specs=o_spec,
        ),
        compiler_params=pltpu.CompilerParams(
            dimension_semantics=("parallel", "parallel"),
            vmem_limit_bytes=vmem_limit),
        cost_estimate=cost,
    )(alpha, x_p, w_prep, b_prep)

    return out_p[:, :D] if Dp != D else out_p


def simplex_linear_ref(x, w, b, skip_logit, *, learnable_skip=True):
    alpha = (jax.nn.sigmoid(jnp.asarray(skip_logit, jnp.float32))
             if learnable_skip else jnp.asarray(0.5, jnp.float32))
    xf = x.astype(jnp.float32)
    y = xf @ w.astype(jnp.float32).T + b.astype(jnp.float32)
    return (alpha * xf + (1.0 - alpha) * y).astype(x.dtype)


if __name__ == "__main__":
    key = jax.random.PRNGKey(0)

    def check(batch, data_dim, tag, tm=None):
        kx, kw, kb, ks = jax.random.split(jax.random.fold_in(key, tag), 4)
        x = jax.random.normal(kx, (batch, data_dim), dtype=jnp.float32)
        w = jax.random.normal(kw, (data_dim, data_dim), dtype=jnp.float32) / jnp.sqrt(data_dim)
        b = jax.random.normal(kb, (data_dim,), dtype=jnp.float32) * 0.01
        skip_logit = jax.random.normal(ks, (), dtype=jnp.float32) * 0.1
        w_prep, b_prep = prepare_simplex_linear_params(w, b)   # one-time (init) prep
        out = jax.block_until_ready(
            simplex_linear(x, w_prep, b_prep, skip_logit, learnable_skip=True, tm=tm))
        ref = simplex_linear_ref(x, w, b, skip_logit, learnable_skip=True)
        assert out.shape == (batch, data_dim)
        assert jnp.allclose(out, ref, atol=1e-4, rtol=1e-4), (
            f"mismatch vs reference (batch={batch}, data_dim={data_dim})")

    check(8, 32, 0)            # module-scale demo (D padded 32 -> 128), single tile
    check(20, 160, 1)          # padded feature dim (160 -> 256), full-extent batch block
    check(16, 640, 2)          # multiple output-feature tiles (weight-innermost order)
    check(64, 640, 3, tm=16)   # num_m > 1 -> batch-innermost grid order path
    print("KERNEL_OK")
</pallas_src>

<mosaic_0001>
module attributes {stable_mosaic.version = 11 : i64} {
  func.func @kernel(%arg0: i32, %arg1: i32, %arg2: memref<1xf32, #tpu.memory_space<smem>>, %arg3: memref<8x128xf32, #tpu.memory_space<vmem>>, %arg4: memref<128x128xf32, #tpu.memory_space<vmem>>, %arg5: memref<1x128xf32, #tpu.memory_space<vmem>>, %arg6: memref<8x128xf32, #tpu.memory_space<vmem>>) attributes {dimension_semantics = [#tpu.dimension_semantics<parallel>, #tpu.dimension_semantics<parallel>], iteration_bounds = array<i64: 1, 1>, scalar_prefetch = 0 : i64, scratch_operands = 0 : i64, tpu.core_type = #tpu.core_type<tc>, window_params = [{transform_indices = @transform_0, window_bounds = array<i64: 1>}, {transform_indices = @transform_1, window_bounds = array<i64: 8, 128>}, {transform_indices = @transform_2, window_bounds = array<i64: 128, 128>}, {transform_indices = @transform_3, window_bounds = array<i64: 1, 128>}, {transform_indices = @transform_4, window_bounds = array<i64: 8, 128>}]} {
    %c0 = arith.constant 0 : index
    %c0_0 = arith.constant 0 : index
    %0 = vector.load %arg3[%c0, %c0_0] : memref<8x128xf32, #tpu.memory_space<vmem>>, vector<8x128xf32>
    %c0_1 = arith.constant 0 : index
    %c0_2 = arith.constant 0 : index
    %1 = vector.load %arg4[%c0_1, %c0_2] : memref<128x128xf32, #tpu.memory_space<vmem>>, vector<128x128xf32>
    %cst = arith.constant dense<0.000000e+00> : vector<8x128xf32>
    %2 = tpu.matmul %0, %1, %cst {dimension_numbers = #tpu.dot_dimension_numbers<[1], [0], [0], [1], [0, 0, 1, 1], [], []>} : vector<8x128xf32>, vector<128x128xf32>, vector<8x128xf32> -> vector<8x128xf32>
    %c0_3 = arith.constant 0 : index
    %c0_4 = arith.constant 0 : index
    %3 = vector.load %arg5[%c0_3, %c0_4] : memref<1x128xf32, #tpu.memory_space<vmem>>, vector<1x128xf32>
    %4 = vector.broadcast %3 : vector<1x128xf32> to vector<8x128xf32>
    %5 = arith.addf %2, %4 : vector<8x128xf32>
    %c128_i32 = arith.constant 128 : i32
    %6 = arith.muli %arg1, %c128_i32 : i32
    %7 = tpu.assume_multiple %6, 128 : i32
    %c0_5 = arith.constant 0 : index
    %8 = arith.index_cast %7 : i32 to index
    %9 = vector.load %arg3[%c0_5, %8] : memref<8x128xf32, #tpu.memory_space<vmem>>, vector<8x128xf32>
    %c0_6 = arith.constant 0 : index
    %10 = memref.load %arg2[%c0_6] : memref<1xf32, #tpu.memory_space<smem>>
    %cst_7 = arith.constant 1.000000e+00 : f32
    %11 = arith.subf %cst_7, %10 : f32
    %12 = arith.subf %5, %9 : vector<8x128xf32>
    %13 = vector.broadcast %11 : f32 to vector<8x128xf32>
    %14 = arith.mulf %13, %12 : vector<8x128xf32>
    %15 = arith.addf %9, %14 : vector<8x128xf32>
    %c0_8 = arith.constant 0 : index
    %c0_9 = arith.constant 0 : index
    %16 = vector.load %arg6[%c0_8, %c0_9] : memref<8x128xf32, #tpu.memory_space<vmem>>, vector<8x128xf32>
    tpu.vector_store %arg6[%c0_8, %c0_9], %15 {strides = array<i32>} : memref<8x128xf32, #tpu.memory_space<vmem>>, vector<8x128xf32>,
    return
  }
  func.func @transform_0(%arg0: i32, %arg1: i32) -> i32 {
    %c0_i32 = arith.constant 0 : i32
    %c0_i32_0 = arith.constant 0 : i32
    return %c0_i32 : i32
  }
  func.func @transform_1(%arg0: i32, %arg1: i32) -> (i32, i32) {
    %c0_i32 = arith.constant 0 : i32
    %c0_i32_0 = arith.constant 0 : i32
    return %arg0, %c0_i32 : i32, i32
  }
  func.func @transform_2(%arg0: i32, %arg1: i32) -> (i32, i32) {
    %c0_i32 = arith.constant 0 : i32
    %c0_i32_0 = arith.constant 0 : i32
    return %c0_i32, %arg1 : i32, i32
  }
  func.func @transform_3(%arg0: i32, %arg1: i32) -> (i32, i32) {
    %c0_i32 = arith.constant 0 : i32
    %c0_i32_0 = arith.constant 0 : i32
    return %c0_i32, %arg1 : i32, i32
  }
  func.func @transform_4(%arg0: i32, %arg1: i32) -> (i32, i32) {
    %c0_i32 = arith.constant 0 : i32
    return %arg0, %arg1 : i32, i32
  }
}

</mosaic_0001>

<llo_original>
// kernel: tpu_custom_call.1
$region0: #{tpu_custom_call.1}
  #allocation0 [shape = 'u32[]', space=smem, size = 0x4, offset = 0x4, fixed_abs, tag = 'smem constant byte address 0x4 - core index']
  #allocation1 [shape = 'u32[72,128]{1,0:T(1,128)}', space=vmem, size = 0x9000, scoped, tag = 'internal scratch']
  #allocation2 [shape = 'f32[1]{0:T(128)S(6)}', space=smem, size = 0x200, scoped, tag = 'scoped memory for tpu_custom_call.1']
  %s0 = inlined_call_operand.<no memory space> [shape: f32[1], index: 0, kind: input, shape index: {}]
  %s1 = inlined_call_operand.hbm [shape: f32[8,128], index: 1, kind: input, shape index: {}]
  %s2 = inlined_call_operand.hbm [shape: f32[128,128], index: 2, kind: input, shape index: {}]
  %s3 = inlined_call_operand.vmem [shape: f32[1,128], index: 3, kind: input, shape index: {}]
  %s4 = inlined_call_operand.hbm [shape: f32[8,128], index: 4, kind: output, shape index: {}]
  %s5 = sld [smem:[#allocation0]]
  $region34: #{tpu_custom_call.1} parent=0
    _
  %s7 = ssub.s32 1, %s5
  %s8 = scalar_select 0, %s7, %s5
  %9 = sst [smem:[#allocation2]] %s0
  $region1: #{tpu_custom_call.1} parent=0
    #allocation3 [shape = 'u8[4096]{0}', space=vmem, size = 0x1000, scoped, tag = 'input window, operand 1, single buffered']
    #allocation4 [shape = 's32[1]{0}', space=sflag, size = 0x4, scoped, tag = 'scoped memory for tpu_custom_call.1']
    #allocation5 [shape = 's32[1]{0}', space=sflag, size = 0x4, scoped, tag = 'scoped memory for tpu_custom_call.1']
    #allocation6 [shape = 'u8[65536]{0}', space=vmem, size = 0x10000, scoped, tag = 'input window, operand 2, single buffered']
    #allocation7 [shape = 's32[1]{0}', space=sflag, size = 0x4, scoped, tag = 'scoped memory for tpu_custom_call.1']
    #allocation8 [shape = 'u8[4096]{0}', space=vmem, size = 0x1000, scoped, tag = 'output window, operand 0, single buffered']
    %10 = vsyncpa [#allocation4], 0
    %11 = vsyncpa [#allocation7], 0
    %12 = vsyncpa [#allocation5], 0
    // Predicated region
    $region2: #{tpu_custom_call.1} parent=1 // pred_check
      _
    $region3: #{tpu_custom_call.1} parent=1 // pred_check_branch
      %14 = sbr.rel (0) target = $region5
    $region4: #{tpu_custom_call.1} parent=1 // pred_region
      _
    $region5: #{tpu_custom_call.1} parent=1 // pred_fallthru
      _
    // Predicated region
    $region6: #{tpu_custom_call.1} parent=1 // pred_check
      _
    $region7: #{tpu_custom_call.1} parent=1 // pred_check_branch
      %16 = sbr.rel (0) target = $region9
    $region8: #{tpu_custom_call.1} parent=1 // pred_region
      %18 = vsyncadd [#allocation4], 0
      %s20 = sshll.u32 %s1, 4
      %s21 = int_to_ptr.hbm [resolvable:$true] %s20
      %s22 = sshll.u32 [#allocation3], 4
      %s23 = int_to_ptr.vmem [resolvable:$true] %s22
      %25 = dma.hbm_to_vmem [thread:$0]  %s21, 128, %s23, [#allocation4]
    $region9: #{tpu_custom_call.1} parent=1 // pred_fallthru
      _
    // Predicated region
    $region10: #{tpu_custom_call.1} parent=1 // pred_check
      _
    $region11: #{tpu_custom_call.1} parent=1 // pred_check_branch
      %27 = sbr.rel (0) target = $region13
    $region12: #{tpu_custom_call.1} parent=1 // pred_region
      %29 = vsyncadd [#allocation7], 0
      %s30 = sshll.u32 %s2, 4
      %s31 = int_to_ptr.hbm [resolvable:$true] %s30
      %s32 = sshll.u32 [#allocation6], 4
      %s33 = int_to_ptr.vmem [resolvable:$true] %s32
      %38 = dma.hbm_to_vmem [thread:$0]  %s31, 2048, %s33, [#allocation7], 128, 128, 8
    $region13: #{tpu_custom_call.1} parent=1 // pred_fallthru
      _
    // Predicated region
    $region14: #{tpu_custom_call.1} parent=1 // pred_check
      _
    $region15: #{tpu_custom_call.1} parent=1 // pred_check_branch
      %40 = sbr.rel (0) target = $region17
    $region16: #{tpu_custom_call.1} parent=1 // pred_region
      _
    $region17: #{tpu_custom_call.1} parent=1 // pred_fallthru
      _
    // Predicated region
    $region18: #{tpu_custom_call.1} parent=1 // pred_check
      _
    $region19: #{tpu_custom_call.1} parent=1 // pred_check_branch
      %42 = sbr.rel (0) target = $region21
    $region20: #{tpu_custom_call.1} parent=1 // pred_region
      %44 = dma.done [#allocation4], 128
    $region21: #{tpu_custom_call.1} parent=1 // pred_fallthru
      _
    // Predicated region
    $region22: #{tpu_custom_call.1} parent=1 // pred_check
      _
    $region23: #{tpu_custom_call.1} parent=1 // pred_check_branch
      %46 = sbr.rel (0) target = $region25
    $region24: #{tpu_custom_call.1} parent=1 // pred_region
      %48 = dma.done [#allocation7], 2048
    $region25: #{tpu_custom_call.1} parent=1 // pred_fallthru
      _
    %v49 = vld [vmem:[#allocation3] sm:$0xff]
    %v50 = vld [vmem:[#allocation6] sm:$0xff]
    %v51 = vld [vmem:[#allocation6 + $0x8] sm:$0xff]
    %v52 = vld [vmem:[#allocation6 + $0x10] sm:$0xff]
    %v53 = vld [vmem:[#allocation6 + $0x18] sm:$0xff]
    %v54 = vld [vmem:[#allocation6 + $0x20] sm:$0xff]
    %v55 = vld [vmem:[#allocation6 + $0x28] sm:$0xff]
    %v56 = vld [vmem:[#allocation6 + $0x30] sm:$0xff]
    %v57 = vld [vmem:[#allocation6 + $0x38] sm:$0xff]
    %v58 = vld [vmem:[#allocation6 + $0x40] sm:$0xff]
    %v59 = vld [vmem:[#allocation6 + $0x48] sm:$0xff]
    %v60 = vld [vmem:[#allocation6 + $0x50] sm:$0xff]
    %v61 = vld [vmem:[#allocation6 + $0x58] sm:$0xff]
    %v62 = vld [vmem:[#allocation6 + $0x60] sm:$0xff]
    %v63 = vld [vmem:[#allocation6 + $0x68] sm:$0xff]
    %v64 = vld [vmem:[#allocation6 + $0x70] sm:$0xff]
    %v65 = vld [vmem:[#allocation6 + $0x78] sm:$0xff]
    %v66 = vld [vmem:[%s3] sm:$0x1]
    %v68 = vperm.slane %v66, 0
    %70 = vmatpush.msra.mxu0 %v65
    %71 = vmatpush.msra.mxu0 %v64
    %72 = vmatpush.msra.mxu0 %v63
    %73 = vmatpush.msra.mxu0 %v62
    %74 = vmatpush.msra.mxu0 %v61
    %75 = vmatpush.msra.mxu0 %v60
    %76 = vmatpush.msra.mxu0 %v59
    %77 = vmatpush.msra.mxu0 %v58
    %78 = vmatpush.msra.mxu0 %v57
    %79 = vmatpush.msra.mxu0 %v56
    %80 = vmatpush.msra.mxu0 %v55
    %81 = vmatpush.msra.mxu0 %v54
    %82 = vmatpush.msra.mxu0 %v53
    %83 = vmatpush.msra.mxu0 %v52
    %84 = vmatpush.msra.mxu0 %v51
    %85 = vmatpush.msra.mxu0 %v50
    %86 = vmatmul.f32.gmra.mxu0 %v49
    %v87 = vpop.f32.mrf.mxu0
    %v88 = vadd.f32 %v68, %v87
    %89 = vdwg.mxu0
    %s90 = smul.u32 0, 128
    %s91 = sshra.s32 %s90, 7
    %s92 = sand.u32 %s90, 127
    %s93 = scalar_lea.vmem [#allocation3], %s91
    %v94 = vld [vmem:[%s93] sm:$0xff]
    %s95 = sld [smem:[#allocation2]]
    %s96 = ssub.f32 1.0, %s95
    %v97 = vsub.f32 %v88, %v94
    %v98 = vstv %s96
    %v99 = vmul.f32 %v98, %v97
    %v100 = vadd.f32 %v94, %v99
    %101 = vst [vmem:[#allocation8] sm:$0xff] %v100
    // Predicated region
    $region26: #{tpu_custom_call.1} parent=1 // pred_check
      _
    $region27: #{tpu_custom_call.1} parent=1 // pred_check_branch
      %103 = sbr.rel (0) target = $region29
    $region28: #{tpu_custom_call.1} parent=1 // pred_region
      %105 = vsyncadd [#allocation5], 0
      %s107 = sshll.u32 [#allocation8], 4
      %s108 = int_to_ptr.vmem [resolvable:$true] %s107
      %s109 = sshll.u32 %s4, 4
      %s110 = int_to_ptr.hbm [resolvable:$true] %s109
      %112 = dma.vmem_to_hbm [thread:$0]  %s108, 128, %s110, [#allocation5]
    $region29: #{tpu_custom_call.1} parent=1 // pred_fallthru
      _
    // Predicated region
    $region30: #{tpu_custom_call.1} parent=1 // pred_check
      _
    $region31: #{tpu_custom_call.1} parent=1 // pred_check_branch
      %114 = sbr.rel (0) target = $region33
    $region32: #{tpu_custom_call.1} parent=1 // pred_region
      %116 = dma.done [#allocation5], 128
    $region33: #{tpu_custom_call.1} parent=1 // pred_fallthru
      _
    %117 = vsyncpa [#allocation4], 1
    %118 = vsyncpa [#allocation7], 1
    %119 = vsyncpa [#allocation5], 1

</llo_original>
